<compile_context>
chip_gen: v7x
topology: tpu7x:2x2x1
jax: 0.10.0
libtpu: 0.0.40
codegen_flags: <defaults>
</compile_context>

<pallas_src>
import jax
import jax.numpy as jnp
from jax.experimental import pallas as pl
from jax.experimental.pallas import tpu as pltpu


def direct_lay_kernel(x_hbm_ref, o_hbm_ref, copy_sem):
    # Single whole-array HBM->HBM DMA; the DMA engines drive HBM bandwidth
    # directly, no VMEM staging, no vector load/store slots consumed.
    cp = pltpu.make_async_copy(x_hbm_ref, o_hbm_ref, copy_sem)
    cp.start()
    cp.wait()


def direct_lay_forward(x):
    """Pallas equivalent of torch's x.unsqueeze(-1): (...,) -> (..., 1)."""
    copied = pl.pallas_call(
        direct_lay_kernel,
        out_shape=jax.ShapeDtypeStruct(x.shape, x.dtype),
        # Leave both operands in place (HBM); no BlockSpec tiling, no grid.
        in_specs=[pl.BlockSpec(memory_space=pl.ANY)],
        out_specs=pl.BlockSpec(memory_space=pl.ANY),
        scratch_shapes=[pltpu.SemaphoreType.DMA],
    )(x)
    # Trailing unit dim is a metadata-only reshape; no data movement and no
    # masked partial stores regardless of the size of the last axis.
    return copied[..., None]


def direct_lay_reference(x):
    # The truly free implementation (what XLA would do anyway).
    return jnp.expand_dims(x, -1)


if __name__ == "__main__":
    key = jax.random.PRNGKey(0)
    k1, k2 = jax.random.split(key)

    # Small (batch, seq) case consistent with the module's use.
    B, S = 4, 8
    x = jax.random.normal(k1, (B, S), jnp.float32) * 10.0
    out = direct_lay_forward(x)
    out = jax.block_until_ready(out)
    assert out.shape == (B, S, 1), out.shape
    assert jnp.array_equal(out, direct_lay_reference(x)), "mismatch (small case)"

    # Larger case: exercises the same single-DMA path (shape/dtype agnostic).
    B2, S2 = 32, 128
    x2 = jax.random.normal(k2, (B2, S2), jnp.bfloat16)
    out2 = direct_lay_forward(x2)
    out2 = jax.block_until_ready(out2)
    assert out2.shape == (B2, S2, 1), out2.shape
    assert jnp.array_equal(out2, direct_lay_reference(x2)), "mismatch (bf16 case)"

    print("KERNEL_OK")
</pallas_src>

<mosaic_0001>
module attributes {stable_mosaic.version = 11 : i64} {
  func.func @direct_lay_kernel(%arg0: memref<4x8xf32, #tpu.memory_space<any>>, %arg1: memref<4x8xf32, #tpu.memory_space<any>>, %arg2: memref<!tpu.dma_semaphore, #tpu.memory_space<semaphore_mem>>) attributes {dimension_semantics = [], scalar_prefetch = 0 : i64, scratch_operands = 1 : i64, tpu.core_type = #tpu.core_type<tc>} {
    tpu.enqueue_dma source(%arg0 : memref<4x8xf32, #tpu.memory_space<any>>) target(%arg1 : memref<4x8xf32, #tpu.memory_space<any>>) target_semaphore(%arg2 : memref<!tpu.dma_semaphore, #tpu.memory_space<semaphore_mem>>)
    tpu.wait_dma2 semaphore(%arg2 : memref<!tpu.dma_semaphore, #tpu.memory_space<semaphore_mem>>) src(%arg0 : memref<4x8xf32, #tpu.memory_space<any>>) dst(%arg1 : memref<4x8xf32, #tpu.memory_space<any>>)
    return
  }
}

</mosaic_0001>

<llo_original>
// kernel: tpu_custom_call.1
$region0: #{tpu_custom_call.1}
  #allocation0 [shape = 'u32[]', space=smem, size = 0x4, offset = 0x4, fixed_abs, tag = 'smem constant byte address 0x4 - core index']
  #allocation1 [shape = 'u32[144,128]{1,0:T(1,128)}', space=vmem, size = 0x12000, scoped, tag = 'internal scratch']
  #allocation2 [shape = 's32[1]{0}', space=sflag, size = 0x4, scoped, tag = 'scratch operand']
  #allocation3 [shape = 's32[]', space=sflag, size = 0x4, offset = 0, fixed_abs, tag = 'sflag constant byte address 0x0 - dummy sync flag']
  #allocation4 [shape = 'u32[0]{0}', space=smem, size = 0, offset = 0, fixed_abs, tag = 'smem constant byte address 0x0 - null']
  %s0 = inlined_call_operand.hbm [shape: f32[4,8], index: 0, kind: input, shape index: {}]
  %s1 = inlined_call_operand.hbm [shape: f32[4,8], index: 1, kind: output, shape index: {}]
  %s2 = sld [smem:[#allocation0]]
  $region2: #{tpu_custom_call.1} parent=0
    _
  %s4 = ssub.s32 1, %s2
  %s5 = scalar_select 0, %s4, %s2
  %s7 = sshll.u32 1, 14
  %s8 = sxor.u32 4294967295, %s7
  %s11 = sshll.u32 3, 24
  %s12 = sxor.u32 4294967295, %s11
  %s13 = sand.u32 0, %s12
  %s15 = sor.u32 %s13, 0
  %18 = dma.general %s0, 64, %s1, [#allocation2], [#allocation3], [#allocation4], %s15, 0
  %s19 = smul.u32 4, 1
  %s20 = sshll.u32 %s19, 4
  %21 = dma.done [#allocation2], %s20
  %22 = vsyncmov [#allocation2]
  %s23 = vpop.sfrf %22
  %p24 = scmp.eq.s32.totalorder %s23, 0
  %p25 = pneg %p24
  %27 = shalt.err (%p25)

</llo_original>
